<compile_context>
chip_gen: v7x
topology: tpu7x:2x2x1
jax: 0.10.0
libtpu: 0.0.40
codegen_flags: <defaults>
</compile_context>

<pallas_src>
import functools

import jax
import jax.numpy as jnp
from jax import lax
from jax.experimental import pallas as pl
from jax.experimental.pallas import tpu as pltpu

HIDDEN = 32
N_LAYERS = 5        # Linear layers: 2->32, 32->32, 32->32, 32->32, 32->1
LANES = 128
FEAT_PAD = 8        # input features zero-padded 2 -> 8 (sublane-aligned MXU K dim)


def _cdiv(a, b):
    return -(-a // b)


def addnet_kernel(x_ref,
                  w1_ref, b1_ref,
                  w2_ref, b2_ref,
                  w3_ref, b3_ref,
                  w4_ref, b4_ref,
                  w5_ref, b5_ref,
                  o_ref,
                  *, act_dtype, approx_sigmoid: bool):
    """One grid step = `cpt` register-resident chunks of `chunk` batch lanes each."""
    cpt = x_ref.shape[0]          # chunks per tile (static)

    def chunk_body(c, carry):
        xc = x_ref[c]                                           # (8, CHUNK), mm dtype

        # ---- Layer 1: Linear(2->32) on the MXU (K zero-padded to 8). ----
        h = jnp.dot(w1_ref[...], xc, preferred_element_type=jnp.float32)
        h = h + b1_ref[...]                                     # (32, CHUNK) f32
        h = jnp.maximum(h.astype(act_dtype), 0)                 # packed bf16 ReLU on fast path

        # ---- Layers 2..4: Linear(32->32) on the MXU, f32 accumulation. ----
        for w_ref, b_ref in ((w2_ref, b2_ref), (w3_ref, b3_ref), (w4_ref, b4_ref)):
            a = jnp.dot(w_ref[...], h, preferred_element_type=jnp.float32) + b_ref[...]
            h = jnp.maximum(a.astype(act_dtype), 0)

        # ---- Layer 5: Linear(32->1) on the MXU (M zero-padded to 8, keep row 0). ----
        # TODO(synk): on v7x, bias adds could be folded into the MRB via pltpu.matmul_* if
        # the VALU is still the binding slot after these changes.
        y8 = jnp.dot(w5_ref[...], h, preferred_element_type=jnp.float32)   # (8, CHUNK)
        y = y8[0:1, :] + b5_ref[...]                                       # (1, CHUNK) f32

        # ---- Sigmoid: exp on the EUP; reciprocal optionally approximate (EUP). ----
        denom = 1.0 + jnp.exp(-y)
        if approx_sigmoid:
            sig = pl.reciprocal(denom, approx=True)
        else:
            sig = 1.0 / denom
        o_ref[c] = sig.astype(o_ref.dtype)                      # lane-dense (1, CHUNK) store
        return carry

    lax.fori_loop(0, cpt, chunk_body, 0)


def init_params(key, hidden=HIDDEN, n_layers=N_LAYERS):
    """torch.nn.Linear-style U(-1/sqrt(fan_in), 1/sqrt(fan_in)); w stored (in, out)."""
    dims = [2] + [hidden] * (n_layers - 1) + [1]
    params = []
    for i in range(n_layers):
        fan_in, fan_out = dims[i], dims[i + 1]
        key, kw, kb = jax.random.split(key, 3)
        bound = 1.0 / jnp.sqrt(jnp.float32(fan_in))
        w = jax.random.uniform(kw, (fan_in, fan_out), jnp.float32, -bound, bound)
        b = jax.random.uniform(kb, (1, fan_out), jnp.float32, -bound, bound)
        params.append((w, b))
    return params


def addnet_forward(x, params, *, tile_b=32768, chunk=512, use_bf16=False,
                   approx_sigmoid=None):
    """y = sigmoid(MLP(x)), x: (B, 2) f32 -> (B, 1) f32.

    use_bf16=True is the v6e/v7x fast path (bf16 MXU operands + bf16 packed ReLU,
    f32 accumulation).  Keep the default f32 path on v5e (no bf16 VPU/EUP).
    """
    B = x.shape[0]
    if approx_sigmoid is None:
        approx_sigmoid = use_bf16

    # Register-resident chunk width (lanes) and batch tile (lanes per grid step).
    chunk = max(LANES, (int(chunk) // LANES) * LANES)
    tile_b = max(chunk, (int(tile_b) // chunk) * chunk)

    b_chunks = _cdiv(B, chunk)
    cpt = max(1, min(tile_b // chunk, b_chunks))          # chunks per grid tile
    if b_chunks >= 2 and _cdiv(b_chunks, cpt) < 2:
        cpt = _cdiv(b_chunks, 2)                          # keep >=2 tiles (v7x megacore)
    num_tiles = _cdiv(b_chunks, cpt)
    total_chunks = num_tiles * cpt
    b_pad = total_chunks * chunk

    mm_dtype = jnp.bfloat16 if use_bf16 else jnp.float32   # MXU operand dtype
    act_dtype = jnp.bfloat16 if use_bf16 else jnp.float32  # elementwise/activation dtype

    # Batch-in-lanes, chunked layout: (B,2) -> (total_chunks, 8, chunk), zero padded.
    # Single fused pad + reshape + transpose + cast pass in XLA.
    xc = jnp.pad(x, ((0, b_pad - B), (0, FEAT_PAD - 2)))
    xc = xc.reshape(total_chunks, chunk, FEAT_PAD).transpose(0, 2, 1).astype(mm_dtype)

    (w1, b1), (w2, b2), (w3, b3), (w4, b4), (w5, b5) = params
    w1p = jnp.pad(w1.T, ((0, 0), (0, FEAT_PAD - 2))).astype(mm_dtype)   # (32, 8)
    w5p = jnp.pad(w5.T, ((0, FEAT_PAD - 1), (0, 0))).astype(mm_dtype)   # (8, 32), row 0 real
    flat = [
        xc,
        w1p,                    b1.T.astype(jnp.float32),               # (32,8), (32,1)
        w2.T.astype(mm_dtype),  b2.T.astype(jnp.float32),               # (32,32), (32,1)
        w3.T.astype(mm_dtype),  b3.T.astype(jnp.float32),
        w4.T.astype(mm_dtype),  b4.T.astype(jnp.float32),
        w5p,                    b5.reshape(1, 1).astype(jnp.float32),   # (8,32), (1,1)
    ]

    x_spec = pl.BlockSpec((cpt, FEAT_PAD, chunk), lambda i: (i, 0, 0))
    out_spec = pl.BlockSpec((cpt, 1, chunk), lambda i: (i, 0, 0))
    # Parameters: full-array blocks with constant index_map -> VMEM-resident across
    # all grid steps (no per-step DMA).
    param_specs = [pl.BlockSpec(a.shape, lambda i: (0, 0)) for a in flat[1:]]
    in_specs = [x_spec] + param_specs

    # VMEM hint: double-buffered x/y tiles + resident params + small chunk temps.
    # Cap at 48 MiB so the hint stays safe on v7x (64 MiB physical VMEM).
    param_bytes = sum(int(a.size) * jnp.dtype(a.dtype).itemsize for a in flat[1:])
    x_block_bytes = cpt * FEAT_PAD * chunk * jnp.dtype(mm_dtype).itemsize
    out_block_bytes = cpt * chunk * 4
    act_bytes = 4 * HIDDEN * chunk * 4
    vmem_limit = 2 * (x_block_bytes + out_block_bytes) + param_bytes + act_bytes + (8 << 20)
    vmem_limit = int(min(max(vmem_limit, 32 << 20), 48 << 20))

    flops = 2 * b_pad * (FEAT_PAD * HIDDEN + 3 * HIDDEN * HIDDEN + HIDDEN * FEAT_PAD)
    bytes_accessed = (b_pad * FEAT_PAD * jnp.dtype(mm_dtype).itemsize   # x in
                      + b_pad * 4                                       # y out
                      + param_bytes)
    cost = pl.CostEstimate(flops=flops, transcendentals=b_pad,
                           bytes_accessed=bytes_accessed)

    out = pl.pallas_call(
        functools.partial(addnet_kernel, act_dtype=act_dtype,
                          approx_sigmoid=approx_sigmoid),
        out_shape=jax.ShapeDtypeStruct((total_chunks, 1, chunk), jnp.float32),
        grid_spec=pltpu.PrefetchScalarGridSpec(
            num_scalar_prefetch=0,
            grid=(num_tiles,),
            in_specs=in_specs,
            out_specs=out_spec,
        ),
        compiler_params=pltpu.CompilerParams(
            dimension_semantics=("parallel",),
            vmem_limit_bytes=vmem_limit,
        ),
        cost_estimate=cost,
    )(*flat)

    # (total_chunks, 1, chunk) is row-major in batch order -> strip padding, return (B, 1).
    return out.reshape(b_pad)[:B].reshape(B, 1)


def addnet_reference(x, params):
    h = x
    for i, (w, b) in enumerate(params):
        h = h @ w + b
        if i < len(params) - 1:
            h = jnp.maximum(h, 0.0)
    return jax.nn.sigmoid(h)


if __name__ == "__main__":
    key = jax.random.PRNGKey(0)
    key, kx = jax.random.split(key)
    B = 8
    x = jax.random.normal(kx, (B, 2), jnp.float32)
    params = init_params(jax.random.PRNGKey(0))

    y_ref = addnet_reference(x, params)

    # Exact f32 path (single tile, padded to one 512-lane chunk).
    y = jax.block_until_ready(addnet_forward(x, params))
    assert y.shape == (B, 1)
    assert jnp.allclose(y, y_ref, atol=1e-5, rtol=1e-5), (y, y_ref)

    # bf16 fast path (v6e/v7x): bf16 MXU operands + bf16 ReLU, f32 accumulation,
    # approximate-reciprocal sigmoid.
    y_fast = jax.block_until_ready(addnet_forward(x, params, use_bf16=True))
    assert y_fast.shape == (B, 1)
    assert jnp.allclose(y_fast, y_ref, atol=2e-2, rtol=2e-2), (y_fast, y_ref)

    # Multi-tile grid + in-kernel chunk loop + batch padding path.
    key, kx2 = jax.random.split(key)
    x2 = jax.random.normal(kx2, (2000, 2), jnp.float32)
    y2 = jax.block_until_ready(addnet_forward(x2, params, tile_b=1024))
    assert y2.shape == (2000, 1)
    assert jnp.allclose(y2, addnet_reference(x2, params), atol=1e-5, rtol=1e-5)

    print("KERNEL_OK")
</pallas_src>

<mosaic_0001>
module attributes {stable_mosaic.version = 11 : i64} {
  func.func @addnet_kernel(%arg0: i32, %arg1: memref<1x8x512xf32, #tpu.memory_space<vmem>>, %arg2: memref<32x8xf32, #tpu.memory_space<vmem>>, %arg3: memref<32x1xf32, #tpu.memory_space<vmem>>, %arg4: memref<32x32xf32, #tpu.memory_space<vmem>>, %arg5: memref<32x1xf32, #tpu.memory_space<vmem>>, %arg6: memref<32x32xf32, #tpu.memory_space<vmem>>, %arg7: memref<32x1xf32, #tpu.memory_space<vmem>>, %arg8: memref<32x32xf32, #tpu.memory_space<vmem>>, %arg9: memref<32x1xf32, #tpu.memory_space<vmem>>, %arg10: memref<8x32xf32, #tpu.memory_space<vmem>>, %arg11: memref<1x1xf32, #tpu.memory_space<vmem>>, %arg12: memref<1x1x512xf32, #tpu.memory_space<vmem>>) attributes {dimension_semantics = [#tpu.dimension_semantics<parallel>], iteration_bounds = array<i64: 1>, scalar_prefetch = 0 : i64, scratch_operands = 0 : i64, tpu.core_type = #tpu.core_type<tc>, window_params = [{transform_indices = @transform_0, window_bounds = array<i64: 1, 8, 512>}, {pipeline_mode = #tpu.pipeline_mode<synchronous>, transform_indices = @transform_1, window_bounds = array<i64: 32, 8>}, {pipeline_mode = #tpu.pipeline_mode<synchronous>, transform_indices = @transform_2, window_bounds = array<i64: 32, 1>}, {pipeline_mode = #tpu.pipeline_mode<synchronous>, transform_indices = @transform_3, window_bounds = array<i64: 32, 32>}, {pipeline_mode = #tpu.pipeline_mode<synchronous>, transform_indices = @transform_4, window_bounds = array<i64: 32, 1>}, {pipeline_mode = #tpu.pipeline_mode<synchronous>, transform_indices = @transform_5, window_bounds = array<i64: 32, 32>}, {pipeline_mode = #tpu.pipeline_mode<synchronous>, transform_indices = @transform_6, window_bounds = array<i64: 32, 1>}, {pipeline_mode = #tpu.pipeline_mode<synchronous>, transform_indices = @transform_7, window_bounds = array<i64: 32, 32>}, {pipeline_mode = #tpu.pipeline_mode<synchronous>, transform_indices = @transform_8, window_bounds = array<i64: 32, 1>}, {pipeline_mode = #tpu.pipeline_mode<synchronous>, transform_indices = @transform_9, window_bounds = array<i64: 8, 32>}, {pipeline_mode = #tpu.pipeline_mode<synchronous>, transform_indices = @transform_10, window_bounds = array<i64: 1, 1>}, {transform_indices = @transform_11, window_bounds = array<i64: 1, 1, 512>}]} {
    %c0_i32 = arith.constant 0 : i32
    %0 = arith.index_cast %c0_i32 : i32 to index
    %c0 = arith.constant 0 : index
    %c0_0 = arith.constant 0 : index
    %1 = vector.load %arg1[%0, %c0, %c0_0] : memref<1x8x512xf32, #tpu.memory_space<vmem>>, vector<1x8x512xf32>
    %2 = vector.shape_cast %1 : vector<1x8x512xf32> to vector<8x512xf32>
    %c0_1 = arith.constant 0 : index
    %c0_2 = arith.constant 0 : index
    %3 = vector.load %arg2[%c0_1, %c0_2] : memref<32x8xf32, #tpu.memory_space<vmem>>, vector<32x8xf32>
    %cst = arith.constant dense<0.000000e+00> : vector<32x512xf32>
    %4 = tpu.matmul %3, %2, %cst {dimension_numbers = #tpu.dot_dimension_numbers<[1], [0], [0], [1], [0, 0, 1, 1], [], []>} : vector<32x8xf32>, vector<8x512xf32>, vector<32x512xf32> -> vector<32x512xf32>
    %c0_3 = arith.constant 0 : index
    %c0_4 = arith.constant 0 : index
    %5 = vector.load %arg3[%c0_3, %c0_4] : memref<32x1xf32, #tpu.memory_space<vmem>>, vector<32x1xf32>
    %6 = vector.broadcast %5 : vector<32x1xf32> to vector<32x512xf32>
    %7 = arith.addf %4, %6 : vector<32x512xf32>
    %cst_5 = arith.constant 0.000000e+00 : f32
    %8 = vector.broadcast %cst_5 : f32 to vector<32x512xf32>
    %9 = arith.maximumf %7, %8 : vector<32x512xf32>
    %c0_6 = arith.constant 0 : index
    %c0_7 = arith.constant 0 : index
    %10 = vector.load %arg4[%c0_6, %c0_7] : memref<32x32xf32, #tpu.memory_space<vmem>>, vector<32x32xf32>
    %cst_8 = arith.constant dense<0.000000e+00> : vector<32x512xf32>
    %11 = tpu.matmul %10, %9, %cst_8 {dimension_numbers = #tpu.dot_dimension_numbers<[1], [0], [0], [1], [0, 0, 1, 1], [], []>} : vector<32x32xf32>, vector<32x512xf32>, vector<32x512xf32> -> vector<32x512xf32>
    %c0_9 = arith.constant 0 : index
    %c0_10 = arith.constant 0 : index
    %12 = vector.load %arg5[%c0_9, %c0_10] : memref<32x1xf32, #tpu.memory_space<vmem>>, vector<32x1xf32>
    %13 = vector.broadcast %12 : vector<32x1xf32> to vector<32x512xf32>
    %14 = arith.addf %11, %13 : vector<32x512xf32>
    %cst_11 = arith.constant 0.000000e+00 : f32
    %15 = vector.broadcast %cst_11 : f32 to vector<32x512xf32>
    %16 = arith.maximumf %14, %15 : vector<32x512xf32>
    %c0_12 = arith.constant 0 : index
    %c0_13 = arith.constant 0 : index
    %17 = vector.load %arg6[%c0_12, %c0_13] : memref<32x32xf32, #tpu.memory_space<vmem>>, vector<32x32xf32>
    %cst_14 = arith.constant dense<0.000000e+00> : vector<32x512xf32>
    %18 = tpu.matmul %17, %16, %cst_14 {dimension_numbers = #tpu.dot_dimension_numbers<[1], [0], [0], [1], [0, 0, 1, 1], [], []>} : vector<32x32xf32>, vector<32x512xf32>, vector<32x512xf32> -> vector<32x512xf32>
    %c0_15 = arith.constant 0 : index
    %c0_16 = arith.constant 0 : index
    %19 = vector.load %arg7[%c0_15, %c0_16] : memref<32x1xf32, #tpu.memory_space<vmem>>, vector<32x1xf32>
    %20 = vector.broadcast %19 : vector<32x1xf32> to vector<32x512xf32>
    %21 = arith.addf %18, %20 : vector<32x512xf32>
    %cst_17 = arith.constant 0.000000e+00 : f32
    %22 = vector.broadcast %cst_17 : f32 to vector<32x512xf32>
    %23 = arith.maximumf %21, %22 : vector<32x512xf32>
    %c0_18 = arith.constant 0 : index
    %c0_19 = arith.constant 0 : index
    %24 = vector.load %arg8[%c0_18, %c0_19] : memref<32x32xf32, #tpu.memory_space<vmem>>, vector<32x32xf32>
    %cst_20 = arith.constant dense<0.000000e+00> : vector<32x512xf32>
    %25 = tpu.matmul %24, %23, %cst_20 {dimension_numbers = #tpu.dot_dimension_numbers<[1], [0], [0], [1], [0, 0, 1, 1], [], []>} : vector<32x32xf32>, vector<32x512xf32>, vector<32x512xf32> -> vector<32x512xf32>
    %c0_21 = arith.constant 0 : index
    %c0_22 = arith.constant 0 : index
    %26 = vector.load %arg9[%c0_21, %c0_22] : memref<32x1xf32, #tpu.memory_space<vmem>>, vector<32x1xf32>
    %27 = vector.broadcast %26 : vector<32x1xf32> to vector<32x512xf32>
    %28 = arith.addf %25, %27 : vector<32x512xf32>
    %cst_23 = arith.constant 0.000000e+00 : f32
    %29 = vector.broadcast %cst_23 : f32 to vector<32x512xf32>
    %30 = arith.maximumf %28, %29 : vector<32x512xf32>
    %c0_24 = arith.constant 0 : index
    %c0_25 = arith.constant 0 : index
    %31 = vector.load %arg10[%c0_24, %c0_25] : memref<8x32xf32, #tpu.memory_space<vmem>>, vector<8x32xf32>
    %cst_26 = arith.constant dense<0.000000e+00> : vector<8x512xf32>
    %32 = tpu.matmul %31, %30, %cst_26 {dimension_numbers = #tpu.dot_dimension_numbers<[1], [0], [0], [1], [0, 0, 1, 1], [], []>} : vector<8x32xf32>, vector<32x512xf32>, vector<8x512xf32> -> vector<8x512xf32>
    %33 = vector.extract_strided_slice %32 {offsets = [0, 0], sizes = [1, 512], strides = [1, 1]} : vector<8x512xf32> to vector<1x512xf32>
    %c0_27 = arith.constant 0 : index
    %c0_28 = arith.constant 0 : index
    %34 = vector.load %arg11[%c0_27, %c0_28] : memref<1x1xf32, #tpu.memory_space<vmem>>, vector<1x1xf32>
    %35 = vector.broadcast %34 : vector<1x1xf32> to vector<1x512xf32>
    %36 = arith.addf %33, %35 : vector<1x512xf32>
    %cst_29 = arith.constant 0.000000e+00 : f32
    %37 = vector.broadcast %cst_29 : f32 to vector<1x512xf32>
    %38 = arith.subf %37, %36 : vector<1x512xf32>
    %39 = math.exp %38 : vector<1x512xf32>
    %cst_30 = arith.constant 1.000000e+00 : f32
    %40 = vector.broadcast %cst_30 : f32 to vector<1x512xf32>
    %41 = arith.addf %40, %39 : vector<1x512xf32>
    %cst_31 = arith.constant 1.000000e+00 : f32
    %42 = vector.broadcast %cst_31 : f32 to vector<1x512xf32>
    %43 = arith.divf %42, %41 : vector<1x512xf32>
    %44 = arith.index_cast %c0_i32 : i32 to index
    %c0_32 = arith.constant 0 : index
    %c0_33 = arith.constant 0 : index
    %45 = vector.load %arg12[%44, %c0_32, %c0_33] : memref<1x1x512xf32, #tpu.memory_space<vmem>>, vector<1x1x512xf32>
    %46 = vector.shape_cast %45 : vector<1x1x512xf32> to vector<1x512xf32>
    %47 = vector.shape_cast %43 : vector<1x512xf32> to vector<1x1x512xf32>
    tpu.vector_store %arg12[%44, %c0_32, %c0_33], %47 {strides = array<i32>} : memref<1x1x512xf32, #tpu.memory_space<vmem>>, vector<1x1x512xf32>,
    %c1_i32 = arith.constant 1 : i32
    return
  }
  func.func @transform_0(%arg0: i32) -> (i32, i32, i32) {
    %c0_i32 = arith.constant 0 : i32
    %c0_i32_0 = arith.constant 0 : i32
    %c0_i32_1 = arith.constant 0 : i32
    return %arg0, %c0_i32, %c0_i32_0 : i32, i32, i32
  }
  func.func @transform_1(%arg0: i32) -> (i32, i32) {
    %c0_i32 = arith.constant 0 : i32
    %c0_i32_0 = arith.constant 0 : i32
    %c0_i32_1 = arith.constant 0 : i32
    return %c0_i32, %c0_i32_0 : i32, i32
  }
  func.func @transform_2(%arg0: i32) -> (i32, i32) {
    %c0_i32 = arith.constant 0 : i32
    %c0_i32_0 = arith.constant 0 : i32
    %c0_i32_1 = arith.constant 0 : i32
    return %c0_i32, %c0_i32_0 : i32, i32
  }
  func.func @transform_3(%arg0: i32) -> (i32, i32) {
    %c0_i32 = arith.constant 0 : i32
    %c0_i32_0 = arith.constant 0 : i32
    %c0_i32_1 = arith.constant 0 : i32
    return %c0_i32, %c0_i32_0 : i32, i32
  }
  func.func @transform_4(%arg0: i32) -> (i32, i32) {
    %c0_i32 = arith.constant 0 : i32
    %c0_i32_0 = arith.constant 0 : i32
    %c0_i32_1 = arith.constant 0 : i32
    return %c0_i32, %c0_i32_0 : i32, i32
  }
  func.func @transform_5(%arg0: i32) -> (i32, i32) {
    %c0_i32 = arith.constant 0 : i32
    %c0_i32_0 = arith.constant 0 : i32
    %c0_i32_1 = arith.constant 0 : i32
    return %c0_i32, %c0_i32_0 : i32, i32
  }
  func.func @transform_6(%arg0: i32) -> (i32, i32) {
    %c0_i32 = arith.constant 0 : i32
    %c0_i32_0 = arith.constant 0 : i32
    %c0_i32_1 = arith.constant 0 : i32
    return %c0_i32, %c0_i32_0 : i32, i32
  }
  func.func @transform_7(%arg0: i32) -> (i32, i32) {
    %c0_i32 = arith.constant 0 : i32
    %c0_i32_0 = arith.constant 0 : i32
    %c0_i32_1 = arith.constant 0 : i32
    return %c0_i32, %c0_i32_0 : i32, i32
  }
  func.func @transform_8(%arg0: i32) -> (i32, i32) {
    %c0_i32 = arith.constant 0 : i32
    %c0_i32_0 = arith.constant 0 : i32
    %c0_i32_1 = arith.constant 0 : i32
    return %c0_i32, %c0_i32_0 : i32, i32
  }
  func.func @transform_9(%arg0: i32) -> (i32, i32) {
    %c0_i32 = arith.constant 0 : i32
    %c0_i32_0 = arith.constant 0 : i32
    %c0_i32_1 = arith.constant 0 : i32
    return %c0_i32, %c0_i32_0 : i32, i32
  }
  func.func @transform_10(%arg0: i32) -> (i32, i32) {
    %c0_i32 = arith.constant 0 : i32
    %c0_i32_0 = arith.constant 0 : i32
    %c0_i32_1 = arith.constant 0 : i32
    return %c0_i32, %c0_i32_0 : i32, i32
  }
  func.func @transform_11(%arg0: i32) -> (i32, i32, i32) {
    %c0_i32 = arith.constant 0 : i32
    %c0_i32_0 = arith.constant 0 : i32
    %c0_i32_1 = arith.constant 0 : i32
    return %arg0, %c0_i32, %c0_i32_0 : i32, i32, i32
  }
}

</mosaic_0001>

<llo_original>
// kernel: tpu_custom_call.1
$region0: #{tpu_custom_call.1}
  #allocation0 [shape = 'u32[]', space=smem, size = 0x4, offset = 0x4, fixed_abs, tag = 'smem constant byte address 0x4 - core index']
  #allocation1 [shape = 'u32[144,128]{1,0:T(1,128)}', space=vmem, size = 0x12000, scoped, tag = 'internal scratch']
  #allocation2 [shape = 'f32[1,1]{1,0:T(1,128)S(1)}', space=vmem, size = 0x200, scoped, tag = 'scoped memory for tpu_custom_call.1']
  %s0 = inlined_call_operand.vmem [shape: f32[1,8,512], index: 0, kind: input, shape index: {}]
  %s1 = inlined_call_operand.vmem [shape: f32[32,8], index: 1, kind: input, shape index: {}]
  %s2 = inlined_call_operand.vmem [shape: f32[32,1], index: 2, kind: input, shape index: {}]
  %s3 = inlined_call_operand.vmem [shape: f32[32,32], index: 3, kind: input, shape index: {}]
  %s4 = inlined_call_operand.vmem [shape: f32[32,1], index: 4, kind: input, shape index: {}]
  %s5 = inlined_call_operand.vmem [shape: f32[32,32], index: 5, kind: input, shape index: {}]
  %s6 = inlined_call_operand.vmem [shape: f32[32,1], index: 6, kind: input, shape index: {}]
  %s7 = inlined_call_operand.vmem [shape: f32[32,32], index: 7, kind: input, shape index: {}]
  %s8 = inlined_call_operand.vmem [shape: f32[32,1], index: 8, kind: input, shape index: {}]
  %s9 = inlined_call_operand.vmem [shape: f32[8,32], index: 9, kind: input, shape index: {}]
  %s10 = inlined_call_operand.<no memory space> [shape: f32[1,1], index: 10, kind: input, shape index: {}]
  %s11 = inlined_call_operand.hbm [shape: f32[1,1,512], index: 11, kind: output, shape index: {}]
  %s12 = sld [smem:[#allocation0]]
  $region54: #{tpu_custom_call.1} parent=0
    _
  %s14 = ssub.s32 1, %s12
  %s15 = scalar_select 0, %s14, %s12
  %v16 = vstv %s10
  %17 = vst [vmem:[#allocation2] sm:$0x1] %v16
  $region1: #{tpu_custom_call.1} parent=0
    #allocation3 [shape = 'u8[2048]{0}', space=vmem, size = 0x800, scoped, tag = 'output window, operand 0, single buffered']
    #allocation4 [shape = 's32[1]{0}', space=sflag, size = 0x4, scoped, tag = 'scoped memory for tpu_custom_call.1']
    %18 = vsyncpa [#allocation4], 0
    // Predicated region
    $region2: #{tpu_custom_call.1} parent=1 // pred_check
      _
    $region3: #{tpu_custom_call.1} parent=1 // pred_check_branch
      %20 = sbr.rel (0) target = $region5
    $region4: #{tpu_custom_call.1} parent=1 // pred_region
      _
    $region5: #{tpu_custom_call.1} parent=1 // pred_fallthru
      _
    // Predicated region
    $region6: #{tpu_custom_call.1} parent=1 // pred_check
      _
    $region7: #{tpu_custom_call.1} parent=1 // pred_check_branch
      %22 = sbr.rel (0) target = $region9
    $region8: #{tpu_custom_call.1} parent=1 // pred_region
      _
    $region9: #{tpu_custom_call.1} parent=1 // pred_fallthru
      _
    // Predicated region
    $region10: #{tpu_custom_call.1} parent=1 // pred_check
      _
    $region11: #{tpu_custom_call.1} parent=1 // pred_check_branch
      %24 = sbr.rel (0) target = $region13
    $region12: #{tpu_custom_call.1} parent=1 // pred_region
      _
    $region13: #{tpu_custom_call.1} parent=1 // pred_fallthru
      _
    // Predicated region
    $region14: #{tpu_custom_call.1} parent=1 // pred_check
      _
    $region15: #{tpu_custom_call.1} parent=1 // pred_check_branch
      %26 = sbr.rel (0) target = $region17
    $region16: #{tpu_custom_call.1} parent=1 // pred_region
      _
    $region17: #{tpu_custom_call.1} parent=1 // pred_fallthru
      _
    // Predicated region
    $region18: #{tpu_custom_call.1} parent=1 // pred_check
      _
    $region19: #{tpu_custom_call.1} parent=1 // pred_check_branch
      %28 = sbr.rel (0) target = $region21
    $region20: #{tpu_custom_call.1} parent=1 // pred_region
      _
    $region21: #{tpu_custom_call.1} parent=1 // pred_fallthru
      _
    // Predicated region
    $region22: #{tpu_custom_call.1} parent=1 // pred_check
      _
    $region23: #{tpu_custom_call.1} parent=1 // pred_check_branch
      %30 = sbr.rel (0) target = $region25
    $region24: #{tpu_custom_call.1} parent=1 // pred_region
      _
    $region25: #{tpu_custom_call.1} parent=1 // pred_fallthru
      _
    // Predicated region
    $region26: #{tpu_custom_call.1} parent=1 // pred_check
      _
    $region27: #{tpu_custom_call.1} parent=1 // pred_check_branch
      %32 = sbr.rel (0) target = $region29
    $region28: #{tpu_custom_call.1} parent=1 // pred_region
      _
    $region29: #{tpu_custom_call.1} parent=1 // pred_fallthru
      _
    // Predicated region
    $region30: #{tpu_custom_call.1} parent=1 // pred_check
      _
    $region31: #{tpu_custom_call.1} parent=1 // pred_check_branch
      %34 = sbr.rel (0) target = $region33
    $region32: #{tpu_custom_call.1} parent=1 // pred_region
      _
    $region33: #{tpu_custom_call.1} parent=1 // pred_fallthru
      _
    // Predicated region
    $region34: #{tpu_custom_call.1} parent=1 // pred_check
      _
    $region35: #{tpu_custom_call.1} parent=1 // pred_check_branch
      %36 = sbr.rel (0) target = $region37
    $region36: #{tpu_custom_call.1} parent=1 // pred_region
      _
    $region37: #{tpu_custom_call.1} parent=1 // pred_fallthru
      _
    // Predicated region
    $region38: #{tpu_custom_call.1} parent=1 // pred_check
      _
    $region39: #{tpu_custom_call.1} parent=1 // pred_check_branch
      %38 = sbr.rel (0) target = $region41
    $region40: #{tpu_custom_call.1} parent=1 // pred_region
      _
    $region41: #{tpu_custom_call.1} parent=1 // pred_fallthru
      _
    // Predicated region
    $region42: #{tpu_custom_call.1} parent=1 // pred_check
      _
    $region43: #{tpu_custom_call.1} parent=1 // pred_check_branch
      %40 = sbr.rel (0) target = $region45
    $region44: #{tpu_custom_call.1} parent=1 // pred_region
      _
    $region45: #{tpu_custom_call.1} parent=1 // pred_fallthru
      _
    %v41 = vld [vmem:[%s0] sm:$0xff]
    %v42 = vld [vmem:[%s0 + $0x8] sm:$0xff]
    %v43 = vld [vmem:[%s0 + $0x10] sm:$0xff]
    %v44 = vld [vmem:[%s0 + $0x18] sm:$0xff]
    %v45 = vld [vmem:[%s1] sm:$0xff]
    %v46 = vld [vmem:[%s1 + $0x8] sm:$0xff]
    %v47 = vld [vmem:[%s1 + $0x10] sm:$0xff]
    %v48 = vld [vmem:[%s1 + $0x18] sm:$0xff]
    %v49 = vld [vmem:[%s2] sm:$0xff]
    %v50 = vld [vmem:[%s2 + $0x8] sm:$0xff]
    %v51 = vld [vmem:[%s2 + $0x10] sm:$0xff]
    %v52 = vld [vmem:[%s2 + $0x18] sm:$0xff]
    %54 = vset.pattern.permute.xlu0 0
    %55 = vperm.xlu0 %54, %v49
    %v56 = vpop.permute.xlu0 %55
    %59 = vset.pattern.permute.xlu0 0
    %60 = vperm.xlu0 %59, %v50
    %v61 = vpop.permute.xlu0 %60
    %64 = vset.pattern.permute.xlu0 0
    %65 = vperm.xlu0 %64, %v51
    %v66 = vpop.permute.xlu0 %65
    %69 = vset.pattern.permute.xlu0 0
    %70 = vperm.xlu0 %69, %v52
    %v71 = vpop.permute.xlu0 %70
    %vm73 = vcmask 64512
    %v75 = vsel %vm73, %v45, 0
    %v78 = vsel %vm73, %v46, 0
    %v81 = vsel %vm73, %v47, 0
    %v84 = vsel %vm73, %v48, 0
    %86 = vmatprep.subr.mxu0 %v42
    %87 = vmatpush1.msra.mxu0 %v41
    %88 = vmatprep.subr.mxu0 0.0
    %89 = vmatpush1.msra.mxu0 0.0
    %90 = vmatprep.subr.mxu0 0.0
    %91 = vmatpush1.msra.mxu0 0.0
    %92 = vmatprep.subr.mxu0 0.0
    %93 = vmatpush1.msra.mxu0 0.0
    %94 = vmatprep.subr.mxu0 0.0
    %95 = vmatpush1.msra.mxu0 0.0
    %96 = vmatprep.subr.mxu0 0.0
    %97 = vmatpush1.msra.mxu0 0.0
    %98 = vmatprep.subr.mxu0 0.0
    %99 = vmatpush1.msra.mxu0 0.0
    %100 = vmatprep.subr.mxu0 0.0
    %101 = vmatpush1.msra.mxu0 0.0
    %102 = vmatprep.subr.mxu0 0.0
    %103 = vmatpush1.msra.mxu0 0.0
    %104 = vmatprep.subr.mxu0 0.0
    %105 = vmatpush1.msra.mxu0 0.0
    %106 = vmatprep.subr.mxu0 0.0
    %107 = vmatpush1.msra.mxu0 0.0
    %108 = vmatprep.subr.mxu0 0.0
    %109 = vmatpush1.msra.mxu0 0.0
    %110 = vmatprep.subr.mxu0 0.0
    %111 = vmatpush1.msra.mxu0 0.0
    %112 = vmatprep.subr.mxu0 0.0
    %113 = vmatpush1.msra.mxu0 0.0
    %114 = vmatprep.subr.mxu0 0.0
    %115 = vmatpush1.msra.mxu0 0.0
    %116 = vmatprep.subr.mxu0 0.0
    %117 = vmatpush1.msra.mxu0 0.0
    %118 = vmatprep.subr.mxu0 0.0
    %119 = vmatpush1.msra.mxu0 0.0
    %120 = vmatprep.subr.mxu0 0.0
    %121 = vmatpush1.msra.mxu0 0.0
    %122 = vmatprep.subr.mxu0 0.0
    %123 = vmatpush1.msra.mxu0 0.0
    %124 = vmatprep.subr.mxu0 0.0
    %125 = vmatpush1.msra.mxu0 0.0
    %126 = vmatprep.subr.mxu0 0.0
    %127 = vmatpush1.msra.mxu0 0.0
    %128 = vmatprep.subr.mxu0 0.0
    %129 = vmatpush1.msra.mxu0 0.0
    %130 = vmatprep.subr.mxu0 0.0
    %131 = vmatpush1.msra.mxu0 0.0
    %132 = vmatprep.subr.mxu0 0.0
    %133 = vmatpush1.msra.mxu0 0.0
    %134 = vmatprep.subr.mxu0 0.0
    %135 = vmatpush1.msra.mxu0 0.0
    %136 = vmatprep.subr.mxu0 0.0
    %137 = vmatpush1.msra.mxu0 0.0
    %138 = vmatprep.subr.mxu0 0.0
    %139 = vmatpush1.msra.mxu0 0.0
    %140 = vmatprep.subr.mxu0 0.0
    %141 = vmatpush1.msra.mxu0 0.0
    %142 = vmatprep.subr.mxu0 0.0
    %143 = vmatpush1.msra.mxu0 0.0
    %144 = vmatprep.subr.mxu0 0.0
    %145 = vmatpush1.msra.mxu0 0.0
    %146 = vmatprep.subr.mxu0 0.0
    %147 = vmatpush1.msra.mxu0 0.0
    %148 = vmatprep.subr.mxu0 0.0
    %149 = vmatpush1.msra.mxu0 0.0
    %150 = vmatprep.mubr.f32.mxu0 0.0
    %151 = vmatmul.mubr.f32.gmra.mrb[0].mxu0 %v75
    %v152 = vpop.f32.mrb[0].mxu0
    %v153 = vadd.f32 %v56, %v152
    %v154 = vpop.f32.mrb[0].mxu0
    %v155 = vadd.f32 %v56, %v154
    %156 = vmatprep.mubr.f32.mxu0 0.0
    %157 = vmatmul.mubr.f32.gmra.mrb[0].mxu0 %v78
    %v158 = vpop.f32.mrb[0].mxu0
    %v159 = vadd.f32 %v61, %v158
    %v160 = vpop.f32.mrb[0].mxu0
    %v161 = vadd.f32 %v61, %v160
    %162 = vmatprep.mubr.f32.mxu0 0.0
    %163 = vmatmul.mubr.f32.gmra.mrb[0].mxu0 %v81
    %v164 = vpop.f32.mrb[0].mxu0
    %v165 = vadd.f32 %v66, %v164
    %v166 = vpop.f32.mrb[0].mxu0
    %v167 = vadd.f32 %v66, %v166
    %168 = vmatprep.mubr.f32.mxu0 0.0
    %169 = vmatmul.mubr.f32.gmra.mrb[0].mxu0 %v84
    %v170 = vpop.f32.mrb[0].mxu0
    %v171 = vadd.f32 %v71, %v170
    %v172 = vpop.f32.mrb[0].mxu0
    %v173 = vadd.f32 %v71, %v172
    %174 = vdwg.mxu0
    %175 = vmatprep.subr.mxu0 %v44
    %176 = vmatpush1.msra.mxu0 %v43
    %177 = vmatprep.subr.mxu0 0.0
    %178 = vmatpush1.msra.mxu0 0.0
    %179 = vmatprep.subr.mxu0 0.0
    %180 = vmatpush1.msra.mxu0 0.0
    %181 = vmatprep.subr.mxu0 0.0
    %182 = vmatpush1.msra.mxu0 0.0
    %183 = vmatprep.subr.mxu0 0.0
    %184 = vmatpush1.msra.mxu0 0.0
    %185 = vmatprep.subr.mxu0 0.0
    %186 = vmatpush1.msra.mxu0 0.0
    %187 = vmatprep.subr.mxu0 0.0
    %188 = vmatpush1.msra.mxu0 0.0
    %189 = vmatprep.subr.mxu0 0.0
    %190 = vmatpush1.msra.mxu0 0.0
    %191 = vmatprep.subr.mxu0 0.0
    %192 = vmatpush1.msra.mxu0 0.0
    %193 = vmatprep.subr.mxu0 0.0
    %194 = vmatpush1.msra.mxu0 0.0
    %195 = vmatprep.subr.mxu0 0.0
    %196 = vmatpush1.msra.mxu0 0.0
    %197 = vmatprep.subr.mxu0 0.0
    %198 = vmatpush1.msra.mxu0 0.0
    %199 = vmatprep.subr.mxu0 0.0
    %200 = vmatpush1.msra.mxu0 0.0
    %201 = vmatprep.subr.mxu0 0.0
    %202 = vmatpush1.msra.mxu0 0.0
    %203 = vmatprep.subr.mxu0 0.0
    %204 = vmatpush1.msra.mxu0 0.0
    %205 = vmatprep.subr.mxu0 0.0
    %206 = vmatpush1.msra.mxu0 0.0
    %207 = vmatprep.subr.mxu0 0.0
    %208 = vmatpush1.msra.mxu0 0.0
    %209 = vmatprep.subr.mxu0 0.0
    %210 = vmatpush1.msra.mxu0 0.0
    %211 = vmatprep.subr.mxu0 0.0
    %212 = vmatpush1.msra.mxu0 0.0
    %213 = vmatprep.subr.mxu0 0.0
    %214 = vmatpush1.msra.mxu0 0.0
    %215 = vmatprep.subr.mxu0 0.0
    %216 = vmatpush1.msra.mxu0 0.0
    %217 = vmatprep.subr.mxu0 0.0
    %218 = vmatpush1.msra.mxu0 0.0
    %219 = vmatprep.subr.mxu0 0.0
    %220 = vmatpush1.msra.mxu0 0.0
    %221 = vmatprep.subr.mxu0 0.0
    %222 = vmatpush1.msra.mxu0 0.0
    %223 = vmatprep.subr.mxu0 0.0
    %224 = vmatpush1.msra.mxu0 0.0
    %225 = vmatprep.subr.mxu0 0.0
    %226 = vmatpush1.msra.mxu0 0.0
    %227 = vmatprep.subr.mxu0 0.0
    %228 = vmatpush1.msra.mxu0 0.0
    %229 = vmatprep.subr.mxu0 0.0
    %230 = vmatpush1.msra.mxu0 0.0
    %231 = vmatprep.subr.mxu0 0.0
    %232 = vmatpush1.msra.mxu0 0.0
    %233 = vmatprep.subr.mxu0 0.0
    %234 = vmatpush1.msra.mxu0 0.0
    %235 = vmatprep.subr.mxu0 0.0
    %236 = vmatpush1.msra.mxu0 0.0
    %237 = vmatprep.subr.mxu0 0.0
    %238 = vmatpush1.msra.mxu0 0.0
    %239 = vmatprep.mubr.f32.mxu0 0.0
    %240 = vmatmul.mubr.f32.gmra.mrb[0].mxu0 %v75
    %v241 = vpop.f32.mrb[0].mxu0
    %v242 = vadd.f32 %v56, %v241
    %v243 = vpop.f32.mrb[0].mxu0
    %v244 = vadd.f32 %v56, %v243
    %245 = vmatprep.mubr.f32.mxu0 0.0
    %246 = vmatmul.mubr.f32.gmra.mrb[0].mxu0 %v78
    %v247 = vpop.f32.mrb[0].mxu0
    %v248 = vadd.f32 %v61, %v247
    %v249 = vpop.f32.mrb[0].mxu0
    %v250 = vadd.f32 %v61, %v249
    %251 = vmatprep.mubr.f32.mxu0 0.0
    %252 = vmatmul.mubr.f32.gmra.mrb[0].mxu0 %v81
    %v253 = vpop.f32.mrb[0].mxu0
    %v254 = vadd.f32 %v66, %v253
    %v255 = vpop.f32.mrb[0].mxu0
    %v256 = vadd.f32 %v66, %v255
    %257 = vmatprep.mubr.f32.mxu0 0.0
    %258 = vmatmul.mubr.f32.gmra.mrb[0].mxu0 %v84
    %v259 = vpop.f32.mrb[0].mxu0
    %v260 = vadd.f32 %v71, %v259
    %v261 = vpop.f32.mrb[0].mxu0
    %v262 = vadd.f32 %v71, %v261
    %263 = vdwg.mxu0
    %v264 = vmax.f32 %v153, 0.0
    %v265 = vmax.f32 %v155, 0.0
    %v266 = vmax.f32 %v242, 0.0
    %v267 = vmax.f32 %v244, 0.0
    %v268 = vmax.f32 %v159, 0.0
    %v269 = vmax.f32 %v161, 0.0
    %v270 = vmax.f32 %v248, 0.0
    %v271 = vmax.f32 %v250, 0.0
    %v272 = vmax.f32 %v165, 0.0
    %v273 = vmax.f32 %v167, 0.0
    %v274 = vmax.f32 %v254, 0.0
    %v275 = vmax.f32 %v256, 0.0
    %v276 = vmax.f32 %v171, 0.0
    %v277 = vmax.f32 %v173, 0.0
    %v278 = vmax.f32 %v260, 0.0
    %v279 = vmax.f32 %v262, 0.0
    %v280 = vld [vmem:[%s3] sm:$0xff]
    %v281 = vld [vmem:[%s3 + $0x8] sm:$0xff]
    %v282 = vld [vmem:[%s3 + $0x10] sm:$0xff]
    %v283 = vld [vmem:[%s3 + $0x18] sm:$0xff]
    %v284 = vld [vmem:[%s4] sm:$0xff]
    %v285 = vld [vmem:[%s4 + $0x8] sm:$0xff]
    %v286 = vld [vmem:[%s4 + $0x10] sm:$0xff]
    %v287 = vld [vmem:[%s4 + $0x18] sm:$0xff]
    %289 = vset.pattern.permute.xlu0 0
    %290 = vperm.xlu0 %289, %v284
    %v291 = vpop.permute.xlu0 %290
    %294 = vset.pattern.permute.xlu0 0
    %295 = vperm.xlu0 %294, %v285
    %v296 = vpop.permute.xlu0 %295
    %299 = vset.pattern.permute.xlu0 0
    %300 = vperm.xlu0 %299, %v286
    %v301 = vpop.permute.xlu0 %300
    %304 = vset.pattern.permute.xlu0 0
    %305 = vperm.xlu0 %304, %v287
    %v306 = vpop.permute.xlu0 %305
    %vm308 = vcmask 261120
    %v310 = vsel %vm308, %v280, 0
    %v313 = vsel %vm308, %v281, 0
    %v316 = vsel %vm308, %v282, 0
    %v319 = vsel %vm308, %v283, 0
    %321 = vmatprep.subr.mxu0 %v265
    %322 = vmatpush1.msra.mxu0 %v264
    %323 = vmatprep.subr.mxu0 %v269
    %324 = vmatpush1.msra.mxu0 %v268
    %325 = vmatprep.subr.mxu0 %v273
    %326 = vmatpush1.msra.mxu0 %v272
    %327 = vmatprep.subr.mxu0 %v277
    %328 = vmatpush1.msra.mxu0 %v276
    %329 = vmatprep.subr.mxu0 0.0
    %330 = vmatpush1.msra.mxu0 0.0
    %331 = vmatprep.subr.mxu0 0.0
    %332 = vmatpush1.msra.mxu0 0.0
    %333 = vmatprep.subr.mxu0 0.0
    %334 = vmatpush1.msra.mxu0 0.0
    %335 = vmatprep.subr.mxu0 0.0
    %336 = vmatpush1.msra.mxu0 0.0
    %337 = vmatprep.subr.mxu0 0.0
    %338 = vmatpush1.msra.mxu0 0.0
    %339 = vmatprep.subr.mxu0 0.0
    %340 = vmatpush1.msra.mxu0 0.0
    %341 = vmatprep.subr.mxu0 0.0
    %342 = vmatpush1.msra.mxu0 0.0
    %343 = vmatprep.subr.mxu0 0.0
    %344 = vmatpush1.msra.mxu0 0.0
    %345 = vmatprep.subr.mxu0 0.0
    %346 = vmatpush1.msra.mxu0 0.0
    %347 = vmatprep.subr.mxu0 0.0
    %348 = vmatpush1.msra.mxu0 0.0
    %349 = vmatprep.subr.mxu0 0.0
    %350 = vmatpush1.msra.mxu0 0.0
    %351 = vmatprep.subr.mxu0 0.0
    %352 = vmatpush1.msra.mxu0 0.0
    %353 = vmatprep.subr.mxu0 0.0
    %354 = vmatpush1.msra.mxu0 0.0
    %355 = vmatprep.subr.mxu0 0.0
    %356 = vmatpush1.msra.mxu0 0.0
    %357 = vmatprep.subr.mxu0 0.0
    %358 = vmatpush1.msra.mxu0 0.0
    %359 = vmatprep.subr.mxu0 0.0
    %360 = vmatpush1.msra.mxu0 0.0
    %361 = vmatprep.subr.mxu0 0.0
    %362 = vmatpush1.msra.mxu0 0.0
    %363 = vmatprep.subr.mxu0 0.0
    %364 = vmatpush1.msra.mxu0 0.0
    %365 = vmatprep.subr.mxu0 0.0
    %366 = vmatpush1.msra.mxu0 0.0
    %367 = vmatprep.subr.mxu0 0.0
    %368 = vmatpush1.msra.mxu0 0.0
    %369 = vmatprep.subr.mxu0 0.0
    %370 = vmatpush1.msra.mxu0 0.0
    %371 = vmatprep.subr.mxu0 0.0
    %372 = vmatpush1.msra.mxu0 0.0
    %373 = vmatprep.subr.mxu0 0.0
    %374 = vmatpush1.msra.mxu0 0.0
    %375 = vmatprep.subr.mxu0 0.0
    %376 = vmatpush1.msra.mxu0 0.0
    %377 = vmatprep.subr.mxu0 0.0
    %378 = vmatpush1.msra.mxu0 0.0
    %379 = vmatprep.subr.mxu0 0.0
    %380 = vmatpush1.msra.mxu0 0.0
    %381 = vmatprep.subr.mxu0 0.0
    %382 = vmatpush1.msra.mxu0 0.0
    %383 = vmatprep.subr.mxu0 0.0
    %384 = vmatpush1.msra.mxu0 0.0
    %385 = vmatprep.mubr.f32.mxu0 0.0
    %386 = vmatmul.mubr.f32.gmra.mrb[0].mxu0 %v310
    %v387 = vpop.f32.mrb[0].mxu0
    %v388 = vadd.f32 %v291, %v387
    %v389 = vpop.f32.mrb[0].mxu0
    %v390 = vadd.f32 %v291, %v389
    %391 = vmatprep.mubr.f32.mxu0 0.0
    %392 = vmatmul.mubr.f32.gmra.mrb[0].mxu0 %v313
    %v393 = vpop.f32.mrb[0].mxu0
    %v394 = vadd.f32 %v296, %v393
    %v395 = vpop.f32.mrb[0].mxu0
    %v396 = vadd.f32 %v296, %v395
    %397 = vmatprep.mubr.f32.mxu0 0.0
    %398 = vmatmul.mubr.f32.gmra.mrb[0].mxu0 %v316
    %v399 = vpop.f32.mrb[0].mxu0
    %v400 = vadd.f32 %v301, %v399
    %v401 = vpop.f32.mrb[0].mxu0
    %v402 = vadd.f32 %v301, %v401
    %403 = vmatprep.mubr.f32.mxu0 0.0
    %404 = vmatmul.mubr.f32.gmra.mrb[0].mxu0 %v319
    %v405 = vpop.f32.mrb[0].mxu0
    %v406 = vadd.f32 %v306, %v405
    %v407 = vpop.f32.mrb[0].mxu0
    %v408 = vadd.f32 %v306, %v407
    %409 = vdwg.mxu0
    %410 = vmatprep.subr.mxu0 %v267
    %411 = vmatpush1.msra.mxu0 %v266
    %412 = vmatprep.subr.mxu0 %v271
    %413 = vmatpush1.msra.mxu0 %v270
    %414 = vmatprep.subr.mxu0 %v275
    %415 = vmatpush1.msra.mxu0 %v274
    %416 = vmatprep.subr.mxu0 %v279
    %417 = vmatpush1.msra.mxu0 %v278
    %418 = vmatprep.subr.mxu0 0.0
    %419 = vmatpush1.msra.mxu0 0.0
    %420 = vmatprep.subr.mxu0 0.0
    %421 = vmatpush1.msra.mxu0 0.0
    %422 = vmatprep.subr.mxu0 0.0
    %423 = vmatpush1.msra.mxu0 0.0
    %424 = vmatprep.subr.mxu0 0.0
    %425 = vmatpush1.msra.mxu0 0.0
    %426 = vmatprep.subr.mxu0 0.0
    %427 = vmatpush1.msra.mxu0 0.0
    %428 = vmatprep.subr.mxu0 0.0
    %429 = vmatpush1.msra.mxu0 0.0
    %430 = vmatprep.subr.mxu0 0.0
    %431 = vmatpush1.msra.mxu0 0.0
    %432 = vmatprep.subr.mxu0 0.0
    %433 = vmatpush1.msra.mxu0 0.0
    %434 = vmatprep.subr.mxu0 0.0
    %435 = vmatpush1.msra.mxu0 0.0
    %436 = vmatprep.subr.mxu0 0.0
    %437 = vmatpush1.msra.mxu0 0.0
    %438 = vmatprep.subr.mxu0 0.0
    %439 = vmatpush1.msra.mxu0 0.0
    %440 = vmatprep.subr.mxu0 0.0
    %441 = vmatpush1.msra.mxu0 0.0
    %442 = vmatprep.subr.mxu0 0.0
    %443 = vmatpush1.msra.mxu0 0.0
    %444 = vmatprep.subr.mxu0 0.0
    %445 = vmatpush1.msra.mxu0 0.0
    %446 = vmatprep.subr.mxu0 0.0
    %447 = vmatpush1.msra.mxu0 0.0
    %448 = vmatprep.subr.mxu0 0.0
    %449 = vmatpush1.msra.mxu0 0.0
    %450 = vmatprep.subr.mxu0 0.0
    %451 = vmatpush1.msra.mxu0 0.0
    %452 = vmatprep.subr.mxu0 0.0
    %453 = vmatpush1.msra.mxu0 0.0
    %454 = vmatprep.subr.mxu0 0.0
    %455 = vmatpush1.msra.mxu0 0.0
    %456 = vmatprep.subr.mxu0 0.0
    %457 = vmatpush1.msra.mxu0 0.0
    %458 = vmatprep.subr.mxu0 0.0
    %459 = vmatpush1.msra.mxu0 0.0
    %460 = vmatprep.subr.mxu0 0.0
    %461 = vmatpush1.msra.mxu0 0.0
    %462 = vmatprep.subr.mxu0 0.0
    %463 = vmatpush1.msra.mxu0 0.0
    %464 = vmatprep.subr.mxu0 0.0
    %465 = vmatpush1.msra.mxu0 0.0
    %466 = vmatprep.subr.mxu0 0.0
    %467 = vmatpush1.msra.mxu0 0.0
    %468 = vmatprep.subr.mxu0 0.0
    %469 = vmatpush1.msra.mxu0 0.0
    %470 = vmatprep.subr.mxu0 0.0
    %471 = vmatpush1.msra.mxu0 0.0
    %472 = vmatprep.subr.mxu0 0.0
    %473 = vmatpush1.msra.mxu0 0.0
    %474 = vmatprep.mubr.f32.mxu0 0.0
    %475 = vmatmul.mubr.f32.gmra.mrb[0].mxu0 %v310
    %v476 = vpop.f32.mrb[0].mxu0
    %v477 = vadd.f32 %v291, %v476
    %v478 = vpop.f32.mrb[0].mxu0
    %v479 = vadd.f32 %v291, %v478
    %480 = vmatprep.mubr.f32.mxu0 0.0
    %481 = vmatmul.mubr.f32.gmra.mrb[0].mxu0 %v313
    %v482 = vpop.f32.mrb[0].mxu0
    %v483 = vadd.f32 %v296, %v482
    %v484 = vpop.f32.mrb[0].mxu0
    %v485 = vadd.f32 %v296, %v484
    %486 = vmatprep.mubr.f32.mxu0 0.0
    %487 = vmatmul.mubr.f32.gmra.mrb[0].mxu0 %v316
    %v488 = vpop.f32.mrb[0].mxu0
    %v489 = vadd.f32 %v301, %v488
    %v490 = vpop.f32.mrb[0].mxu0
    %v491 = vadd.f32 %v301, %v490
    %492 = vmatprep.mubr.f32.mxu0 0.0
    %493 = vmatmul.mubr.f32.gmra.mrb[0].mxu0 %v319
    %v494 = vpop.f32.mrb[0].mxu0
    %v495 = vadd.f32 %v306, %v494
    %v496 = vpop.f32.mrb[0].mxu0
    %v497 = vadd.f32 %v306, %v496
    %498 = vdwg.mxu0
    %v499 = vmax.f32 %v388, 0.0
    %v500 = vmax.f32 %v390, 0.0
    %v501 = vmax.f32 %v477, 0.0
    %v502 = vmax.f32 %v479, 0.0
    %v503 = vmax.f32 %v394, 0.0
    %v504 = vmax.f32 %v396, 0.0
    %v505 = vmax.f32 %v483, 0.0
    %v506 = vmax.f32 %v485, 0.0
    %v507 = vmax.f32 %v400, 0.0
    %v508 = vmax.f32 %v402, 0.0
    %v509 = vmax.f32 %v489, 0.0
    %v510 = vmax.f32 %v491, 0.0
    %v511 = vmax.f32 %v406, 0.0
    %v512 = vmax.f32 %v408, 0.0
    %v513 = vmax.f32 %v495, 0.0
    %v514 = vmax.f32 %v497, 0.0
    %v515 = vld [vmem:[%s5] sm:$0xff]
    %v516 = vld [vmem:[%s5 + $0x8] sm:$0xff]
    %v517 = vld [vmem:[%s5 + $0x10] sm:$0xff]
    %v518 = vld [vmem:[%s5 + $0x18] sm:$0xff]
    %v519 = vld [vmem:[%s6] sm:$0xff]
    %v520 = vld [vmem:[%s6 + $0x8] sm:$0xff]
    %v521 = vld [vmem:[%s6 + $0x10] sm:$0xff]
    %v522 = vld [vmem:[%s6 + $0x18] sm:$0xff]
    %524 = vset.pattern.permute.xlu0 0
    %525 = vperm.xlu0 %524, %v519
    %v526 = vpop.permute.xlu0 %525
    %529 = vset.pattern.permute.xlu0 0
    %530 = vperm.xlu0 %529, %v520
    %v531 = vpop.permute.xlu0 %530
    %534 = vset.pattern.permute.xlu0 0
    %535 = vperm.xlu0 %534, %v521
    %v536 = vpop.permute.xlu0 %535
    %539 = vset.pattern.permute.xlu0 0
    %540 = vperm.xlu0 %539, %v522
    %v541 = vpop.permute.xlu0 %540
    %v544 = vsel %vm308, %v515, 0
    %v547 = vsel %vm308, %v516, 0
    %v550 = vsel %vm308, %v517, 0
    %v553 = vsel %vm308, %v518, 0
    %555 = vmatprep.subr.mxu0 %v500
    %556 = vmatpush1.msra.mxu0 %v499
    %557 = vmatprep.subr.mxu0 %v504
    %558 = vmatpush1.msra.mxu0 %v503
    %559 = vmatprep.subr.mxu0 %v508
    %560 = vmatpush1.msra.mxu0 %v507
    %561 = vmatprep.subr.mxu0 %v512
    %562 = vmatpush1.msra.mxu0 %v511
    %563 = vmatprep.subr.mxu0 0.0
    %564 = vmatpush1.msra.mxu0 0.0
    %565 = vmatprep.subr.mxu0 0.0
    %566 = vmatpush1.msra.mxu0 0.0
    %567 = vmatprep.subr.mxu0 0.0
    %568 = vmatpush1.msra.mxu0 0.0
    %569 = vmatprep.subr.mxu0 0.0
    %570 = vmatpush1.msra.mxu0 0.0
    %571 = vmatprep.subr.mxu0 0.0
    %572 = vmatpush1.msra.mxu0 0.0
    %573 = vmatprep.subr.mxu0 0.0
    %574 = vmatpush1.msra.mxu0 0.0
    %575 = vmatprep.subr.mxu0 0.0
    %576 = vmatpush1.msra.mxu0 0.0
    %577 = vmatprep.subr.mxu0 0.0
    %578 = vmatpush1.msra.mxu0 0.0
    %579 = vmatprep.subr.mxu0 0.0
    %580 = vmatpush1.msra.mxu0 0.0
    %581 = vmatprep.subr.mxu0 0.0
    %582 = vmatpush1.msra.mxu0 0.0
    %583 = vmatprep.subr.mxu0 0.0
    %584 = vmatpush1.msra.mxu0 0.0
    %585 = vmatprep.subr.mxu0 0.0
    %586 = vmatpush1.msra.mxu0 0.0
    %587 = vmatprep.subr.mxu0 0.0
    %588 = vmatpush1.msra.mxu0 0.0
    %589 = vmatprep.subr.mxu0 0.0
    %590 = vmatpush1.msra.mxu0 0.0
    %591 = vmatprep.subr.mxu0 0.0
    %592 = vmatpush1.msra.mxu0 0.0
    %593 = vmatprep.subr.mxu0 0.0
    %594 = vmatpush1.msra.mxu0 0.0
    %595 = vmatprep.subr.mxu0 0.0
    %596 = vmatpush1.msra.mxu0 0.0
    %597 = vmatprep.subr.mxu0 0.0
    %598 = vmatpush1.msra.mxu0 0.0
    %599 = vmatprep.subr.mxu0 0.0
    %600 = vmatpush1.msra.mxu0 0.0
    %601 = vmatprep.subr.mxu0 0.0
    %602 = vmatpush1.msra.mxu0 0.0
    %603 = vmatprep.subr.mxu0 0.0
    %604 = vmatpush1.msra.mxu0 0.0
    %605 = vmatprep.subr.mxu0 0.0
    %606 = vmatpush1.msra.mxu0 0.0
    %607 = vmatprep.subr.mxu0 0.0
    %608 = vmatpush1.msra.mxu0 0.0
    %609 = vmatprep.subr.mxu0 0.0
    %610 = vmatpush1.msra.mxu0 0.0
    %611 = vmatprep.subr.mxu0 0.0
    %612 = vmatpush1.msra.mxu0 0.0
    %613 = vmatprep.subr.mxu0 0.0
    %614 = vmatpush1.msra.mxu0 0.0
    %615 = vmatprep.subr.mxu0 0.0
    %616 = vmatpush1.msra.mxu0 0.0
    %617 = vmatprep.subr.mxu0 0.0
    %618 = vmatpush1.msra.mxu0 0.0
    %619 = vmatprep.mubr.f32.mxu0 0.0
    %620 = vmatmul.mubr.f32.gmra.mrb[0].mxu0 %v544
    %v621 = vpop.f32.mrb[0].mxu0
    %v622 = vadd.f32 %v526, %v621
    %v623 = vpop.f32.mrb[0].mxu0
    %v624 = vadd.f32 %v526, %v623
    %625 = vmatprep.mubr.f32.mxu0 0.0
    %626 = vmatmul.mubr.f32.gmra.mrb[0].mxu0 %v547
    %v627 = vpop.f32.mrb[0].mxu0
    %v628 = vadd.f32 %v531, %v627
    %v629 = vpop.f32.mrb[0].mxu0
    %v630 = vadd.f32 %v531, %v629
    %631 = vmatprep.mubr.f32.mxu0 0.0
    %632 = vmatmul.mubr.f32.gmra.mrb[0].mxu0 %v550
    %v633 = vpop.f32.mrb[0].mxu0
    %v634 = vadd.f32 %v536, %v633
    %v635 = vpop.f32.mrb[0].mxu0
    %v636 = vadd.f32 %v536, %v635
    %637 = vmatprep.mubr.f32.mxu0 0.0
    %638 = vmatmul.mubr.f32.gmra.mrb[0].mxu0 %v553
    %v639 = vpop.f32.mrb[0].mxu0
    %v640 = vadd.f32 %v541, %v639
    %v641 = vpop.f32.mrb[0].mxu0
    %v642 = vadd.f32 %v541, %v641
    %643 = vdwg.mxu0
    %644 = vmatprep.subr.mxu0 %v502
    %645 = vmatpush1.msra.mxu0 %v501
    %646 = vmatprep.subr.mxu0 %v506
    %647 = vmatpush1.msra.mxu0 %v505
    %648 = vmatprep.subr.mxu0 %v510
    %649 = vmatpush1.msra.mxu0 %v509
    %650 = vmatprep.subr.mxu0 %v514
    %651 = vmatpush1.msra.mxu0 %v513
    %652 = vmatprep.subr.mxu0 0.0
    %653 = vmatpush1.msra.mxu0 0.0
    %654 = vmatprep.subr.mxu0 0.0
    %655 = vmatpush1.msra.mxu0 0.0
    %656 = vmatprep.subr.mxu0 0.0
    %657 = vmatpush1.msra.mxu0 0.0
    %658 = vmatprep.subr.mxu0 0.0
    %659 = vmatpush1.msra.mxu0 0.0
    %660 = vmatprep.subr.mxu0 0.0
    %661 = vmatpush1.msra.mxu0 0.0
    %662 = vmatprep.subr.mxu0 0.0
    %663 = vmatpush1.msra.mxu0 0.0
    %664 = vmatprep.subr.mxu0 0.0
    %665 = vmatpush1.msra.mxu0 0.0
    %666 = vmatprep.subr.mxu0 0.0
    %667 = vmatpush1.msra.mxu0 0.0
    %668 = vmatprep.subr.mxu0 0.0
    %669 = vmatpush1.msra.mxu0 0.0
    %670 = vmatprep.subr.mxu0 0.0
    %671 = vmatpush1.msra.mxu0 0.0
    %672 = vmatprep.subr.mxu0 0.0
    %673 = vmatpush1.msra.mxu0 0.0
    %674 = vmatprep.subr.mxu0 0.0
    %675 = vmatpush1.msra.mxu0 0.0
    %676 = vmatprep.subr.mxu0 0.0
    %677 = vmatpush1.msra.mxu0 0.0
    %678 = vmatprep.subr.mxu0 0.0
    %679 = vmatpush1.msra.mxu0 0.0
    %680 = vmatprep.subr.mxu0 0.0
    %681 = vmatpush1.msra.mxu0 0.0
    %682 = vmatprep.subr.mxu0 0.0
    %683 = vmatpush1.msra.mxu0 0.0
    %684 = vmatprep.subr.mxu0 0.0
    %685 = vmatpush1.msra.mxu0 0.0
    %686 = vmatprep.subr.mxu0 0.0
    %687 = vmatpush1.msra.mxu0 0.0
    %688 = vmatprep.subr.mxu0 0.0
    %689 = vmatpush1.msra.mxu0 0.0
    %690 = vmatprep.subr.mxu0 0.0
    %691 = vmatpush1.msra.mxu0 0.0
    %692 = vmatprep.subr.mxu0 0.0
    %693 = vmatpush1.msra.mxu0 0.0
    %694 = vmatprep.subr.mxu0 0.0
    %695 = vmatpush1.msra.mxu0 0.0
    %696 = vmatprep.subr.mxu0 0.0
    %697 = vmatpush1.msra.mxu0 0.0
    %698 = vmatprep.subr.mxu0 0.0
    %699 = vmatpush1.msra.mxu0 0.0
    %700 = vmatprep.subr.mxu0 0.0
    %701 = vmatpush1.msra.mxu0 0.0
    %702 = vmatprep.subr.mxu0 0.0
    %703 = vmatpush1.msra.mxu0 0.0
    %704 = vmatprep.subr.mxu0 0.0
    %705 = vmatpush1.msra.mxu0 0.0
    %706 = vmatprep.subr.mxu0 0.0
    %707 = vmatpush1.msra.mxu0 0.0
    %708 = vmatprep.mubr.f32.mxu0 0.0
    %709 = vmatmul.mubr.f32.gmra.mrb[0].mxu0 %v544
    %v710 = vpop.f32.mrb[0].mxu0
    %v711 = vadd.f32 %v526, %v710
    %v712 = vpop.f32.mrb[0].mxu0
    %v713 = vadd.f32 %v526, %v712
    %714 = vmatprep.mubr.f32.mxu0 0.0
    %715 = vmatmul.mubr.f32.gmra.mrb[0].mxu0 %v547
    %v716 = vpop.f32.mrb[0].mxu0
    %v717 = vadd.f32 %v531, %v716
    %v718 = vpop.f32.mrb[0].mxu0
    %v719 = vadd.f32 %v531, %v718
    %720 = vmatprep.mubr.f32.mxu0 0.0
    %721 = vmatmul.mubr.f32.gmra.mrb[0].mxu0 %v550
    %v722 = vpop.f32.mrb[0].mxu0
    %v723 = vadd.f32 %v536, %v722
    %v724 = vpop.f32.mrb[0].mxu0
    %v725 = vadd.f32 %v536, %v724
    %726 = vmatprep.mubr.f32.mxu0 0.0
    %727 = vmatmul.mubr.f32.gmra.mrb[0].mxu0 %v553
    %v728 = vpop.f32.mrb[0].mxu0
    %v729 = vadd.f32 %v541, %v728
    %v730 = vpop.f32.mrb[0].mxu0
    %v731 = vadd.f32 %v541, %v730
    %732 = vdwg.mxu0
    %v733 = vmax.f32 %v622, 0.0
    %v734 = vmax.f32 %v624, 0.0
    %v735 = vmax.f32 %v711, 0.0
    %v736 = vmax.f32 %v713, 0.0
    %v737 = vmax.f32 %v628, 0.0
    %v738 = vmax.f32 %v630, 0.0
    %v739 = vmax.f32 %v717, 0.0
    %v740 = vmax.f32 %v719, 0.0
    %v741 = vmax.f32 %v634, 0.0
    %v742 = vmax.f32 %v636, 0.0
    %v743 = vmax.f32 %v723, 0.0
    %v744 = vmax.f32 %v725, 0.0
    %v745 = vmax.f32 %v640, 0.0
    %v746 = vmax.f32 %v642, 0.0
    %v747 = vmax.f32 %v729, 0.0
    %v748 = vmax.f32 %v731, 0.0
    %v749 = vld [vmem:[%s7] sm:$0xff]
    %v750 = vld [vmem:[%s7 + $0x8] sm:$0xff]
    %v751 = vld [vmem:[%s7 + $0x10] sm:$0xff]
    %v752 = vld [vmem:[%s7 + $0x18] sm:$0xff]
    %v753 = vld [vmem:[%s8] sm:$0xff]
    %v754 = vld [vmem:[%s8 + $0x8] sm:$0xff]
    %v755 = vld [vmem:[%s8 + $0x10] sm:$0xff]
    %v756 = vld [vmem:[%s8 + $0x18] sm:$0xff]
    %758 = vset.pattern.permute.xlu0 0
    %759 = vperm.xlu0 %758, %v753
    %v760 = vpop.permute.xlu0 %759
    %763 = vset.pattern.permute.xlu0 0
    %764 = vperm.xlu0 %763, %v754
    %v765 = vpop.permute.xlu0 %764
    %768 = vset.pattern.permute.xlu0 0
    %769 = vperm.xlu0 %768, %v755
    %v770 = vpop.permute.xlu0 %769
    %773 = vset.pattern.permute.xlu0 0
    %774 = vperm.xlu0 %773, %v756
    %v775 = vpop.permute.xlu0 %774
    %v778 = vsel %vm308, %v749, 0
    %v781 = vsel %vm308, %v750, 0
    %v784 = vsel %vm308, %v751, 0
    %v787 = vsel %vm308, %v752, 0
    %789 = vmatprep.subr.mxu0 %v734
    %790 = vmatpush1.msra.mxu0 %v733
    %791 = vmatprep.subr.mxu0 %v738
    %792 = vmatpush1.msra.mxu0 %v737
    %793 = vmatprep.subr.mxu0 %v742
    %794 = vmatpush1.msra.mxu0 %v741
    %795 = vmatprep.subr.mxu0 %v746
    %796 = vmatpush1.msra.mxu0 %v745
    %797 = vmatprep.subr.mxu0 0.0
    %798 = vmatpush1.msra.mxu0 0.0
    %799 = vmatprep.subr.mxu0 0.0
    %800 = vmatpush1.msra.mxu0 0.0
    %801 = vmatprep.subr.mxu0 0.0
    %802 = vmatpush1.msra.mxu0 0.0
    %803 = vmatprep.subr.mxu0 0.0
    %804 = vmatpush1.msra.mxu0 0.0
    %805 = vmatprep.subr.mxu0 0.0
    %806 = vmatpush1.msra.mxu0 0.0
    %807 = vmatprep.subr.mxu0 0.0
    %808 = vmatpush1.msra.mxu0 0.0
    %809 = vmatprep.subr.mxu0 0.0
    %810 = vmatpush1.msra.mxu0 0.0
    %811 = vmatprep.subr.mxu0 0.0
    %812 = vmatpush1.msra.mxu0 0.0
    %813 = vmatprep.subr.mxu0 0.0
    %814 = vmatpush1.msra.mxu0 0.0
    %815 = vmatprep.subr.mxu0 0.0
    %816 = vmatpush1.msra.mxu0 0.0
    %817 = vmatprep.subr.mxu0 0.0
    %818 = vmatpush1.msra.mxu0 0.0
    %819 = vmatprep.subr.mxu0 0.0
    %820 = vmatpush1.msra.mxu0 0.0
    %821 = vmatprep.subr.mxu0 0.0
    %822 = vmatpush1.msra.mxu0 0.0
    %823 = vmatprep.subr.mxu0 0.0
    %824 = vmatpush1.msra.mxu0 0.0
    %825 = vmatprep.subr.mxu0 0.0
    %826 = vmatpush1.msra.mxu0 0.0
    %827 = vmatprep.subr.mxu0 0.0
    %828 = vmatpush1.msra.mxu0 0.0
    %829 = vmatprep.subr.mxu0 0.0
    %830 = vmatpush1.msra.mxu0 0.0
    %831 = vmatprep.subr.mxu0 0.0
    %832 = vmatpush1.msra.mxu0 0.0
    %833 = vmatprep.subr.mxu0 0.0
    %834 = vmatpush1.msra.mxu0 0.0
    %835 = vmatprep.subr.mxu0 0.0
    %836 = vmatpush1.msra.mxu0 0.0
    %837 = vmatprep.subr.mxu0 0.0
    %838 = vmatpush1.msra.mxu0 0.0
    %839 = vmatprep.subr.mxu0 0.0
    %840 = vmatpush1.msra.mxu0 0.0
    %841 = vmatprep.subr.mxu0 0.0
    %842 = vmatpush1.msra.mxu0 0.0
    %843 = vmatprep.subr.mxu0 0.0
    %844 = vmatpush1.msra.mxu0 0.0
    %845 = vmatprep.subr.mxu0 0.0
    %846 = vmatpush1.msra.mxu0 0.0
    %847 = vmatprep.subr.mxu0 0.0
    %848 = vmatpush1.msra.mxu0 0.0
    %849 = vmatprep.subr.mxu0 0.0
    %850 = vmatpush1.msra.mxu0 0.0
    %851 = vmatprep.subr.mxu0 0.0
    %852 = vmatpush1.msra.mxu0 0.0
    %853 = vmatprep.mubr.f32.mxu0 0.0
    %854 = vmatmul.mubr.f32.gmra.mrb[0].mxu0 %v778
    %v855 = vpop.f32.mrb[0].mxu0
    %v856 = vadd.f32 %v760, %v855
    %v857 = vpop.f32.mrb[0].mxu0
    %v858 = vadd.f32 %v760, %v857
    %859 = vmatprep.mubr.f32.mxu0 0.0
    %860 = vmatmul.mubr.f32.gmra.mrb[0].mxu0 %v781
    %v861 = vpop.f32.mrb[0].mxu0
    %v862 = vadd.f32 %v765, %v861
    %v863 = vpop.f32.mrb[0].mxu0
    %v864 = vadd.f32 %v765, %v863
    %865 = vmatprep.mubr.f32.mxu0 0.0
    %866 = vmatmul.mubr.f32.gmra.mrb[0].mxu0 %v784
    %v867 = vpop.f32.mrb[0].mxu0
    %v868 = vadd.f32 %v770, %v867
    %v869 = vpop.f32.mrb[0].mxu0
    %v870 = vadd.f32 %v770, %v869
    %871 = vmatprep.mubr.f32.mxu0 0.0
    %872 = vmatmul.mubr.f32.gmra.mrb[0].mxu0 %v787
    %v873 = vpop.f32.mrb[0].mxu0
    %v874 = vadd.f32 %v775, %v873
    %v875 = vpop.f32.mrb[0].mxu0
    %v876 = vadd.f32 %v775, %v875
    %877 = vdwg.mxu0
    %878 = vmatprep.subr.mxu0 %v736
    %879 = vmatpush1.msra.mxu0 %v735
    %880 = vmatprep.subr.mxu0 %v740
    %881 = vmatpush1.msra.mxu0 %v739
    %882 = vmatprep.subr.mxu0 %v744
    %883 = vmatpush1.msra.mxu0 %v743
    %884 = vmatprep.subr.mxu0 %v748
    %885 = vmatpush1.msra.mxu0 %v747
    %886 = vmatprep.subr.mxu0 0.0
    %887 = vmatpush1.msra.mxu0 0.0
    %888 = vmatprep.subr.mxu0 0.0
    %889 = vmatpush1.msra.mxu0 0.0
    %890 = vmatprep.subr.mxu0 0.0
    %891 = vmatpush1.msra.mxu0 0.0
    %892 = vmatprep.subr.mxu0 0.0
    %893 = vmatpush1.msra.mxu0 0.0
    %894 = vmatprep.subr.mxu0 0.0
    %895 = vmatpush1.msra.mxu0 0.0
    %896 = vmatprep.subr.mxu0 0.0
    %897 = vmatpush1.msra.mxu0 0.0
    %898 = vmatprep.subr.mxu0 0.0
    %899 = vmatpush1.msra.mxu0 0.0
    %900 = vmatprep.subr.mxu0 0.0
    %901 = vmatpush1.msra.mxu0 0.0
    %902 = vmatprep.subr.mxu0 0.0
    %903 = vmatpush1.msra.mxu0 0.0
    %904 = vmatprep.subr.mxu0 0.0
    %905 = vmatpush1.msra.mxu0 0.0
    %906 = vmatprep.subr.mxu0 0.0
    %907 = vmatpush1.msra.mxu0 0.0
    %908 = vmatprep.subr.mxu0 0.0
    %909 = vmatpush1.msra.mxu0 0.0
    %910 = vmatprep.subr.mxu0 0.0
    %911 = vmatpush1.msra.mxu0 0.0
    %912 = vmatprep.subr.mxu0 0.0
    %913 = vmatpush1.msra.mxu0 0.0
    %914 = vmatprep.subr.mxu0 0.0
    %915 = vmatpush1.msra.mxu0 0.0
    %916 = vmatprep.subr.mxu0 0.0
    %917 = vmatpush1.msra.mxu0 0.0
    %918 = vmatprep.subr.mxu0 0.0
    %919 = vmatpush1.msra.mxu0 0.0
    %920 = vmatprep.subr.mxu0 0.0
    %921 = vmatpush1.msra.mxu0 0.0
    %922 = vmatprep.subr.mxu0 0.0
    %923 = vmatpush1.msra.mxu0 0.0
    %924 = vmatprep.subr.mxu0 0.0
    %925 = vmatpush1.msra.mxu0 0.0
    %926 = vmatprep.subr.mxu0 0.0
    %927 = vmatpush1.msra.mxu0 0.0
    %928 = vmatprep.subr.mxu0 0.0
    %929 = vmatpush1.msra.mxu0 0.0
    %930 = vmatprep.subr.mxu0 0.0
    %931 = vmatpush1.msra.mxu0 0.0
    %932 = vmatprep.subr.mxu0 0.0
    %933 = vmatpush1.msra.mxu0 0.0
    %934 = vmatprep.subr.mxu0 0.0
    %935 = vmatpush1.msra.mxu0 0.0
    %936 = vmatprep.subr.mxu0 0.0
    %937 = vmatpush1.msra.mxu0 0.0
    %938 = vmatprep.subr.mxu0 0.0
    %939 = vmatpush1.msra.mxu0 0.0
    %940 = vmatprep.subr.mxu0 0.0
    %941 = vmatpush1.msra.mxu0 0.0
    %942 = vmatprep.mubr.f32.mxu0 0.0
    %943 = vmatmul.mubr.f32.gmra.mrb[0].mxu0 %v778
    %v944 = vpop.f32.mrb[0].mxu0
    %v945 = vadd.f32 %v760, %v944
    %v946 = vpop.f32.mrb[0].mxu0
    %v947 = vadd.f32 %v760, %v946
    %948 = vmatprep.mubr.f32.mxu0 0.0
    %949 = vmatmul.mubr.f32.gmra.mrb[0].mxu0 %v781
    %v950 = vpop.f32.mrb[0].mxu0
    %v951 = vadd.f32 %v765, %v950
    %v952 = vpop.f32.mrb[0].mxu0
    %v953 = vadd.f32 %v765, %v952
    %954 = vmatprep.mubr.f32.mxu0 0.0
    %955 = vmatmul.mubr.f32.gmra.mrb[0].mxu0 %v784
    %v956 = vpop.f32.mrb[0].mxu0
    %v957 = vadd.f32 %v770, %v956
    %v958 = vpop.f32.mrb[0].mxu0
    %v959 = vadd.f32 %v770, %v958
    %960 = vmatprep.mubr.f32.mxu0 0.0
    %961 = vmatmul.mubr.f32.gmra.mrb[0].mxu0 %v787
    %v962 = vpop.f32.mrb[0].mxu0
    %v963 = vadd.f32 %v775, %v962
    %v964 = vpop.f32.mrb[0].mxu0
    %v965 = vadd.f32 %v775, %v964
    %966 = vdwg.mxu0
    %v967 = vmax.f32 %v856, 0.0
    %v968 = vmax.f32 %v858, 0.0
    %v969 = vmax.f32 %v945, 0.0
    %v970 = vmax.f32 %v947, 0.0
    %v971 = vmax.f32 %v862, 0.0
    %v972 = vmax.f32 %v864, 0.0
    %v973 = vmax.f32 %v951, 0.0
    %v974 = vmax.f32 %v953, 0.0
    %v975 = vmax.f32 %v868, 0.0
    %v976 = vmax.f32 %v870, 0.0
    %v977 = vmax.f32 %v957, 0.0
    %v978 = vmax.f32 %v959, 0.0
    %v979 = vmax.f32 %v874, 0.0
    %v980 = vmax.f32 %v876, 0.0
    %v981 = vmax.f32 %v963, 0.0
    %v982 = vmax.f32 %v965, 0.0
    %v983 = vld [vmem:[%s9] sm:$0xff]
    %v985 = vsel %vm308, %v983, 0
    %987 = vmatprep.subr.mxu0 %v968
    %988 = vmatpush1.msra.mxu0 %v967
    %989 = vmatprep.subr.mxu0 %v972
    %990 = vmatpush1.msra.mxu0 %v971
    %991 = vmatprep.subr.mxu0 %v976
    %992 = vmatpush1.msra.mxu0 %v975
    %993 = vmatprep.subr.mxu0 %v980
    %994 = vmatpush1.msra.mxu0 %v979
    %995 = vmatprep.subr.mxu0 0.0
    %996 = vmatpush1.msra.mxu0 0.0
    %997 = vmatprep.subr.mxu0 0.0
    %998 = vmatpush1.msra.mxu0 0.0
    %999 = vmatprep.subr.mxu0 0.0
    %1000 = vmatpush1.msra.mxu0 0.0
    %1001 = vmatprep.subr.mxu0 0.0
    %1002 = vmatpush1.msra.mxu0 0.0
    %1003 = vmatprep.subr.mxu0 0.0
    %1004 = vmatpush1.msra.mxu0 0.0
    %1005 = vmatprep.subr.mxu0 0.0
    %1006 = vmatpush1.msra.mxu0 0.0
    %1007 = vmatprep.subr.mxu0 0.0
    %1008 = vmatpush1.msra.mxu0 0.0
    %1009 = vmatprep.subr.mxu0 0.0
    %1010 = vmatpush1.msra.mxu0 0.0
    %1011 = vmatprep.subr.mxu0 0.0
    %1012 = vmatpush1.msra.mxu0 0.0
    %1013 = vmatprep.subr.mxu0 0.0
    %1014 = vmatpush1.msra.mxu0 0.0
    %1015 = vmatprep.subr.mxu0 0.0
    %1016 = vmatpush1.msra.mxu0 0.0
    %1017 = vmatprep.subr.mxu0 0.0
    %1018 = vmatpush1.msra.mxu0 0.0
    %1019 = vmatprep.subr.mxu0 0.0
    %1020 = vmatpush1.msra.mxu0 0.0
    %1021 = vmatprep.subr.mxu0 0.0
    %1022 = vmatpush1.msra.mxu0 0.0
    %1023 = vmatprep.subr.mxu0 0.0
    %1024 = vmatpush1.msra.mxu0 0.0
    %1025 = vmatprep.subr.mxu0 0.0
    %1026 = vmatpush1.msra.mxu0 0.0
    %1027 = vmatprep.subr.mxu0 0.0
    %1028 = vmatpush1.msra.mxu0 0.0
    %1029 = vmatprep.subr.mxu0 0.0
    %1030 = vmatpush1.msra.mxu0 0.0
    %1031 = vmatprep.subr.mxu0 0.0
    %1032 = vmatpush1.msra.mxu0 0.0
    %1033 = vmatprep.subr.mxu0 0.0
    %1034 = vmatpush1.msra.mxu0 0.0
    %1035 = vmatprep.subr.mxu0 0.0
    %1036 = vmatpush1.msra.mxu0 0.0
    %1037 = vmatprep.subr.mxu0 0.0
    %1038 = vmatpush1.msra.mxu0 0.0
    %1039 = vmatprep.subr.mxu0 0.0
    %1040 = vmatpush1.msra.mxu0 0.0
    %1041 = vmatprep.subr.mxu0 0.0
    %1042 = vmatpush1.msra.mxu0 0.0
    %1043 = vmatprep.subr.mxu0 0.0
    %1044 = vmatpush1.msra.mxu0 0.0
    %1045 = vmatprep.subr.mxu0 0.0
    %1046 = vmatpush1.msra.mxu0 0.0
    %1047 = vmatprep.subr.mxu0 0.0
    %1048 = vmatpush1.msra.mxu0 0.0
    %1049 = vmatprep.subr.mxu0 0.0
    %1050 = vmatpush1.msra.mxu0 0.0
    %1051 = vmatprep.mubr.f32.mxu0 0.0
    %1052 = vmatmul.mubr.f32.gmra.mrb[0].mxu0 %v985
    %v1053 = vpop.f32.mrb[0].mxu0
    %v1054 = vadd.f32 0.0, %v1053
    %v1055 = vpop.f32.mrb[0].mxu0
    %v1056 = vadd.f32 0.0, %v1055
    %1057 = vdwg.mxu0
    %1058 = vmatprep.subr.mxu0 %v970
    %1059 = vmatpush1.msra.mxu0 %v969
    %1060 = vmatprep.subr.mxu0 %v974
    %1061 = vmatpush1.msra.mxu0 %v973
    %1062 = vmatprep.subr.mxu0 %v978
    %1063 = vmatpush1.msra.mxu0 %v977
    %1064 = vmatprep.subr.mxu0 %v982
    %1065 = vmatpush1.msra.mxu0 %v981
    %1066 = vmatprep.subr.mxu0 0.0
    %1067 = vmatpush1.msra.mxu0 0.0
    %1068 = vmatprep.subr.mxu0 0.0
    %1069 = vmatpush1.msra.mxu0 0.0
    %1070 = vmatprep.subr.mxu0 0.0
    %1071 = vmatpush1.msra.mxu0 0.0
    %1072 = vmatprep.subr.mxu0 0.0
    %1073 = vmatpush1.msra.mxu0 0.0
    %1074 = vmatprep.subr.mxu0 0.0
    %1075 = vmatpush1.msra.mxu0 0.0
    %1076 = vmatprep.subr.mxu0 0.0
    %1077 = vmatpush1.msra.mxu0 0.0
    %1078 = vmatprep.subr.mxu0 0.0
    %1079 = vmatpush1.msra.mxu0 0.0
    %1080 = vmatprep.subr.mxu0 0.0
    %1081 = vmatpush1.msra.mxu0 0.0
    %1082 = vmatprep.subr.mxu0 0.0
    %1083 = vmatpush1.msra.mxu0 0.0
    %1084 = vmatprep.subr.mxu0 0.0
    %1085 = vmatpush1.msra.mxu0 0.0
    %1086 = vmatprep.subr.mxu0 0.0
    %1087 = vmatpush1.msra.mxu0 0.0
    %1088 = vmatprep.subr.mxu0 0.0
    %1089 = vmatpush1.msra.mxu0 0.0
    %1090 = vmatprep.subr.mxu0 0.0
    %1091 = vmatpush1.msra.mxu0 0.0
    %1092 = vmatprep.subr.mxu0 0.0
    %1093 = vmatpush1.msra.mxu0 0.0
    %1094 = vmatprep.subr.mxu0 0.0
    %1095 = vmatpush1.msra.mxu0 0.0
    %1096 = vmatprep.subr.mxu0 0.0
    %1097 = vmatpush1.msra.mxu0 0.0
    %1098 = vmatprep.subr.mxu0 0.0
    %1099 = vmatpush1.msra.mxu0 0.0
    %1100 = vmatprep.subr.mxu0 0.0
    %1101 = vmatpush1.msra.mxu0 0.0
    %1102 = vmatprep.subr.mxu0 0.0
    %1103 = vmatpush1.msra.mxu0 0.0
    %1104 = vmatprep.subr.mxu0 0.0
    %1105 = vmatpush1.msra.mxu0 0.0
    %1106 = vmatprep.subr.mxu0 0.0
    %1107 = vmatpush1.msra.mxu0 0.0
    %1108 = vmatprep.subr.mxu0 0.0
    %1109 = vmatpush1.msra.mxu0 0.0
    %1110 = vmatprep.subr.mxu0 0.0
    %1111 = vmatpush1.msra.mxu0 0.0
    %1112 = vmatprep.subr.mxu0 0.0
    %1113 = vmatpush1.msra.mxu0 0.0
    %1114 = vmatprep.subr.mxu0 0.0
    %1115 = vmatpush1.msra.mxu0 0.0
    %1116 = vmatprep.subr.mxu0 0.0
    %1117 = vmatpush1.msra.mxu0 0.0
    %1118 = vmatprep.subr.mxu0 0.0
    %1119 = vmatpush1.msra.mxu0 0.0
    %1120 = vmatprep.subr.mxu0 0.0
    %1121 = vmatpush1.msra.mxu0 0.0
    %1122 = vmatprep.mubr.f32.mxu0 0.0
    %1123 = vmatmul.mubr.f32.gmra.mrb[0].mxu0 %v985
    %v1124 = vpop.f32.mrb[0].mxu0
    %v1125 = vadd.f32 0.0, %v1124
    %v1126 = vpop.f32.mrb[0].mxu0
    %v1127 = vadd.f32 0.0, %v1126
    %1128 = vdwg.mxu0
    %v1129 = vld [vmem:[#allocation2] sm:$0x1]
    %1131 = vset.pattern.permute.xlu0 0
    %1132 = vperm.xlu0 %1131, %v1129
    %v1133 = vpop.permute.xlu0 %1132
    %v1135 = vlaneseq
    %v1136 = vshrl.u32 %v1135, 7
    %v1137 = vsub.s32 0, %v1136
    %v1138 = vrot.slane %v1133, %v1137
    %v1139 = vadd.f32 %v1054, %v1138
    %v1140 = vadd.f32 %v1056, %v1138
    %v1141 = vadd.f32 %v1125, %v1138
    %v1142 = vadd.f32 %v1127, %v1138
    %v1143 = vsub.f32 0.0, %v1139
    %v1144 = vsub.f32 0.0, %v1140
    %v1145 = vsub.f32 0.0, %v1141
    %v1146 = vsub.f32 0.0, %v1142
    %v1147 = vmul.f32 %v1143, 1.442695
    %v1148 = vpow.pop %v1147
    %v1149 = vmul.f32 %v1144, 1.442695
    %v1150 = vpow.pop %v1149
    %v1151 = vmul.f32 %v1145, 1.442695
    %v1152 = vpow.pop %v1151
    %v1153 = vmul.f32 %v1146, 1.442695
    %v1154 = vpow.pop %v1153
    %v1155 = vadd.f32 %v1148, 1.0
    %v1156 = vadd.f32 %v1150, 1.0
    %v1157 = vadd.f32 %v1152, 1.0
    %v1158 = vadd.f32 %v1154, 1.0
    %v1159 = vrcp.pop %v1155
    %v1160 = vmul.f32 1.0, %v1159
    %v1161 = vrcp.pop %v1156
    %v1162 = vmul.f32 1.0, %v1161
    %v1163 = vrcp.pop %v1157
    %v1164 = vmul.f32 1.0, %v1163
    %v1165 = vrcp.pop %v1158
    %v1166 = vmul.f32 1.0, %v1165
    %v1171 = vcombine.low %v1160, %v1162
    %v1172 = vcombine.low %v1164, %v1166
    %v1174 = vunpack.c.l.s4 1966171168
    %v1175 = vunpack.c.0.s8 %v1174
    %v1176 = vlaneseq
    %v1177 = vshrl.u32 %v1176, 7
    %v1178 = vsub.s32 %v1175, %v1177
    %v1179 = vrot.slane %v1171, %v1178
    %v1181 = vunpack.c.l.s4 1966171168
    %v1182 = vunpack.c.0.s8 %v1181
    %v1183 = vlaneseq
    %v1184 = vshrl.u32 %v1183, 7
    %v1185 = vsub.s32 %v1182, %v1184
    %v1186 = vrot.slane %v1172, %v1185
    %v1187 = vcombine.low %v1179, %v1186
    %v1189 = vunpack.c.l.s4 1966171168
    %v1190 = vunpack.c.0.s8 %v1189
    %v1191 = vlaneseq
    %v1192 = vshrl.u32 %v1191, 7
    %v1193 = vsub.s32 %v1190, %v1192
    %v1194 = vrot.slane %v1187, %v1193
    %v1196 = vlaneseq
    %vm1197 = vcmp.ge.s32.totalorder %v1196, 0
    %vm1198 = vcmp.lt.s32.totalorder %v1196, 512
    %vm1199 = vmand %vm1197, %vm1198
    %1200 = vst.msk [vmem:[#allocation3] sm:$0xf] %vm1199, %v1194
    // Predicated region
    $region46: #{tpu_custom_call.1} parent=1 // pred_check
      _
    $region47: #{tpu_custom_call.1} parent=1 // pred_check_branch
      %1202 = sbr.rel (0) target = $region49
    $region48: #{tpu_custom_call.1} parent=1 // pred_region
      %s1204 = ssub.s32 64, 64
      %1205 = vsyncadd [#allocation4], %s1204
      %s1207 = sshll.u32 [#allocation3], 4
      %s1208 = int_to_ptr.vmem [resolvable:$true] %s1207
      %1210 = dma.vmem_to_hbm [thread:$0]  %s1208, 64, %s11, [#allocation4]
    $region49: #{tpu_custom_call.1} parent=1 // pred_fallthru
      _
    // Predicated region
    $region50: #{tpu_custom_call.1} parent=1 // pred_check
      _
    $region51: #{tpu_custom_call.1} parent=1 // pred_check_branch
      %1212 = sbr.rel (0) target = $region53
    $region52: #{tpu_custom_call.1} parent=1 // pred_region
      %1213 = dma.done [#allocation4], 64
    $region53: #{tpu_custom_call.1} parent=1 // pred_fallthru
      _
    %1214 = vsyncpa [#allocation4], 1

</llo_original>
